<compile_context>
chip_gen: v6e
topology: v6e:2x2x1
jax: 0.10.0
libtpu: 0.0.40
codegen_flags: <defaults>
</compile_context>

<pallas_src>
import jax
import jax.numpy as jnp
from jax.experimental import pallas as pl
from jax.experimental.pallas import tpu as pltpu

# ---- small, DIN-consistent config -------------------------------------------
EMBED_DIM = 32          # embed_dim
ATTN_DIM = 32           # attention_dim
MLP_DIMS = (128, 64)    # mlp_dims
SEQ_LEN = 8             # user behavior sequence length
BATCH = 2
NUM_USERS = 20          # field_dims[0]
NUM_ITEMS = 15          # field_dims[1]


def din_kernel(beh_ref, item_ref,
               w1a_ref, w1m_ref, w1b_ref, b1_ref, w2v_ref,
               wm1a_ref, wm1b_ref, bm1_ref,
               wm2_ref, bm2_ref, wov_ref,
               hb_ref,            # SMEM [2]: (b2, bo) scalar biases
               out_ref):
    """One grid step = one tile of BM samples.

    beh_ref : [BM, S, E]  user behavior embeddings
    item_ref: [BM, E]     target item embeddings
    out_ref : [1, BM]     sigmoid probabilities (lane-dense)
    """
    BM, S, E = beh_ref.shape
    f32 = jnp.float32

    beh = beh_ref[...]                                    # [BM, S, E]
    item = item_ref[...]                                  # [BM, E]

    beh2 = beh.reshape(BM * S, E)                         # big-M matmul view
    t3 = jnp.broadcast_to(item[:, None, :], (BM, S, E))
    bt2 = (beh * t3).reshape(BM * S, E)

    # ---- AttentionLayer ---------------------------------------------------
    # cat([b, t, b*t, b-t]) @ W1 folded to:
    #   b @ (Wa+Wd) + (b*t) @ Wc + item @ (Wb-Wd)      (fold done in wrapper)
    h = (jnp.dot(beh2, w1a_ref[...], preferred_element_type=f32)
         + jnp.dot(bt2, w1m_ref[...], preferred_element_type=f32))
    h = h.reshape(BM, S, -1)
    h = h + jnp.dot(item, w1b_ref[...], preferred_element_type=f32)[:, None, :]
    h = jnp.maximum(h + b1_ref[...], 0.0)                 # [BM, S, A]

    # N=1 head matmul -> VPU multiply + lane reduction
    logits = jnp.sum(h * w2v_ref[...], axis=-1) + hb_ref[0]   # [BM, S]
    att_w = jax.nn.sigmoid(logits)                             # [BM, S]
    attended = jnp.sum(att_w[:, :, None] * beh, axis=1)        # [BM, E]

    # ---- MLP head -----------------------------------------------------------
    # combined = cat([attended, item]) @ Wm1 as two matmuls on Wm1 slices.
    x = (jnp.dot(attended, wm1a_ref[...], preferred_element_type=f32)
         + jnp.dot(item,    wm1b_ref[...], preferred_element_type=f32)
         + bm1_ref[...])
    x = jnp.maximum(x, 0.0)                                # [BM, M1]; Dropout -> identity
    x = jnp.maximum(
        jnp.dot(x, wm2_ref[...], preferred_element_type=f32) + bm2_ref[...],
        0.0)                                               # [BM, M2]

    # output layer (N=1) as VPU multiply + lane reduction; lane-dense store.
    out = jax.nn.sigmoid(jnp.sum(x * wov_ref[...], axis=-1) + hb_ref[1])   # [BM]
    out_ref[...] = out.reshape(1, BM).astype(out_ref.dtype)


def din_forward(user_behaviors, target_item, params, *, block_b=256):
    """user_behaviors: int32 [B, S]; target_item: int32 [B] -> float32 [B, 1]."""
    B, S = user_behaviors.shape
    E = params["emb0"].shape[1]

    # Embedding gathers in glue (tiny here).
    beh = params["emb0"][user_behaviors]                   # [B, S, E]
    item = params["emb1"][target_item]                     # [B, E]

    # --- algebraic fold of the concat matmuls (wrapper-side, one-time) ------
    w1 = params["w1"]
    w1a = w1[0 * E:1 * E] + w1[3 * E:4 * E]                # behaviors term
    w1m = w1[2 * E:3 * E]                                  # behaviors*target term
    w1b = w1[1 * E:2 * E] - w1[3 * E:4 * E]                # target (item) term
    wm1 = params["wm1"]
    wm1a, wm1b = wm1[:E], wm1[E:]
    w2row = params["w2"].T                                 # [1, A]
    worow = params["wo"].T                                 # [1, M2]
    head_bias = jnp.concatenate(
        [params["b2"].reshape(-1), params["bo"].reshape(-1)])   # [2] -> SMEM

    # --- batch tiling --------------------------------------------------------
    Bp8 = ((B + 7) // 8) * 8                               # sublane-friendly
    BM = min(block_b, Bp8)
    nb = pl.cdiv(B, BM)
    Bp = nb * BM
    if Bp != B:
        pad = Bp - B
        beh = jnp.pad(beh, ((0, pad), (0, 0), (0, 0)))
        item = jnp.pad(item, ((0, pad), (0, 0)))

    def rep_spec(shape):
        nd = len(shape)
        return pl.BlockSpec(shape, lambda b, _nd=nd: (0,) * _nd)

    out = pl.pallas_call(
        din_kernel,
        out_shape=jax.ShapeDtypeStruct((nb, BM), jnp.float32),
        grid=(nb,),
        in_specs=[
            pl.BlockSpec((BM, S, E), lambda b: (b, 0, 0)),   # behaviors tile
            pl.BlockSpec((BM, E), lambda b: (b, 0)),         # item tile
            rep_spec(w1a.shape), rep_spec(w1m.shape), rep_spec(w1b.shape),
            rep_spec(params["b1"].shape), rep_spec(w2row.shape),
            rep_spec(wm1a.shape), rep_spec(wm1b.shape), rep_spec(params["bm1"].shape),
            rep_spec(params["wm2"].shape), rep_spec(params["bm2"].shape),
            rep_spec(worow.shape),
            pl.BlockSpec(memory_space=pltpu.MemorySpace.SMEM),   # scalar biases
        ],
        out_specs=pl.BlockSpec((1, BM), lambda b: (b, 0)),       # lane-dense output
        compiler_params=pltpu.CompilerParams(
            dimension_semantics=("parallel",)),
    )(beh, item,
      w1a, w1m, w1b, params["b1"], w2row,
      wm1a, wm1b, params["bm1"],
      params["wm2"], params["bm2"], worow,
      head_bias)

    return out.reshape(-1)[:B][:, None]                    # [B, 1]


def din_reference(user_behaviors, target_item, params):
    """Pure-JAX reference mirroring the (intended) PyTorch forward."""
    beh = params["emb0"][user_behaviors]
    item = params["emb1"][target_item]
    t = jnp.broadcast_to(item[:, None, :], beh.shape)
    att_in = jnp.concatenate([beh, t, beh * t, beh - t], axis=-1)
    h = jax.nn.relu(att_in @ params["w1"] + params["b1"])
    w = jax.nn.sigmoid(h @ params["w2"] + params["b2"])
    attended = jnp.sum(w * beh, axis=1)
    combined = jnp.concatenate([attended, item], axis=-1)
    x = jax.nn.relu(combined @ params["wm1"] + params["bm1"])
    x = jax.nn.relu(x @ params["wm2"] + params["bm2"])
    return jax.nn.sigmoid(x @ params["wo"] + params["bo"])


def init_params(key):
    E, A = EMBED_DIM, ATTN_DIM
    M1, M2 = MLP_DIMS
    ks = jax.random.split(key, 8)
    scale = 0.1
    p = {
        "emb0": scale * jax.random.normal(ks[0], (NUM_USERS, E), jnp.float32),
        "emb1": scale * jax.random.normal(ks[1], (NUM_ITEMS, E), jnp.float32),
        # AttentionLayer: Linear(4E -> A), Linear(A -> 1)
        "w1": scale * jax.random.normal(ks[2], (4 * E, A), jnp.float32),
        "b1": jnp.zeros((1, A), jnp.float32),
        "w2": scale * jax.random.normal(ks[3], (A, 1), jnp.float32),
        "b2": jnp.zeros((1, 1), jnp.float32),
        # MLP: Linear(2E -> M1), Linear(M1 -> M2), output Linear(M2 -> 1)
        "wm1": scale * jax.random.normal(ks[4], (2 * E, M1), jnp.float32),
        "bm1": jnp.zeros((1, M1), jnp.float32),
        "wm2": scale * jax.random.normal(ks[5], (M1, M2), jnp.float32),
        "bm2": jnp.zeros((1, M2), jnp.float32),
        "wo": scale * jax.random.normal(ks[6], (M2, 1), jnp.float32),
        "bo": jnp.zeros((1, 1), jnp.float32),
    }
    return p


if __name__ == "__main__":
    key = jax.random.PRNGKey(0)
    pkey, ukey, ikey = jax.random.split(key, 3)
    params = init_params(pkey)

    user_behaviors = jax.random.randint(ukey, (BATCH, SEQ_LEN), 0, NUM_USERS, jnp.int32)
    target_item = jax.random.randint(ikey, (BATCH,), 0, NUM_ITEMS, jnp.int32)

    out = din_forward(user_behaviors, target_item, params)
    out = jax.block_until_ready(out)

    ref = din_reference(user_behaviors, target_item, params)
    assert out.shape == (BATCH, 1)
    assert jnp.allclose(out, ref, atol=1e-5, rtol=1e-5), (out, ref)

    # TODO(synk): the original torch DIN_base.forward passes a [B,S,E] target into
    # AttentionLayer (which would raise); we implement the documented [B,E] target.
    print("KERNEL_OK")
</pallas_src>

<mosaic_0001>
module attributes {stable_mosaic.version = 11 : i64} {
  func.func @din_kernel(%arg0: i32, %arg1: memref<8x8x32xf32, #tpu.memory_space<vmem>>, %arg2: memref<8x32xf32, #tpu.memory_space<vmem>>, %arg3: memref<32x32xf32, #tpu.memory_space<vmem>>, %arg4: memref<32x32xf32, #tpu.memory_space<vmem>>, %arg5: memref<32x32xf32, #tpu.memory_space<vmem>>, %arg6: memref<1x32xf32, #tpu.memory_space<vmem>>, %arg7: memref<1x32xf32, #tpu.memory_space<vmem>>, %arg8: memref<32x128xf32, #tpu.memory_space<vmem>>, %arg9: memref<32x128xf32, #tpu.memory_space<vmem>>, %arg10: memref<1x128xf32, #tpu.memory_space<vmem>>, %arg11: memref<128x64xf32, #tpu.memory_space<vmem>>, %arg12: memref<1x64xf32, #tpu.memory_space<vmem>>, %arg13: memref<1x64xf32, #tpu.memory_space<vmem>>, %arg14: memref<2xf32, #tpu.memory_space<smem>>, %arg15: memref<1x8xf32, #tpu.memory_space<vmem>>) attributes {dimension_semantics = [#tpu.dimension_semantics<parallel>], iteration_bounds = array<i64: 1>, scalar_prefetch = 0 : i64, scratch_operands = 0 : i64, tpu.core_type = #tpu.core_type<tc>, window_params = [{transform_indices = @transform_0, window_bounds = array<i64: 8, 8, 32>}, {transform_indices = @transform_1, window_bounds = array<i64: 8, 32>}, {pipeline_mode = #tpu.pipeline_mode<synchronous>, transform_indices = @transform_2, window_bounds = array<i64: 32, 32>}, {pipeline_mode = #tpu.pipeline_mode<synchronous>, transform_indices = @transform_3, window_bounds = array<i64: 32, 32>}, {pipeline_mode = #tpu.pipeline_mode<synchronous>, transform_indices = @transform_4, window_bounds = array<i64: 32, 32>}, {pipeline_mode = #tpu.pipeline_mode<synchronous>, transform_indices = @transform_5, window_bounds = array<i64: 1, 32>}, {pipeline_mode = #tpu.pipeline_mode<synchronous>, transform_indices = @transform_6, window_bounds = array<i64: 1, 32>}, {pipeline_mode = #tpu.pipeline_mode<synchronous>, transform_indices = @transform_7, window_bounds = array<i64: 32, 128>}, {pipeline_mode = #tpu.pipeline_mode<synchronous>, transform_indices = @transform_8, window_bounds = array<i64: 32, 128>}, {pipeline_mode = #tpu.pipeline_mode<synchronous>, transform_indices = @transform_9, window_bounds = array<i64: 1, 128>}, {pipeline_mode = #tpu.pipeline_mode<synchronous>, transform_indices = @transform_10, window_bounds = array<i64: 128, 64>}, {pipeline_mode = #tpu.pipeline_mode<synchronous>, transform_indices = @transform_11, window_bounds = array<i64: 1, 64>}, {pipeline_mode = #tpu.pipeline_mode<synchronous>, transform_indices = @transform_12, window_bounds = array<i64: 1, 64>}, {transform_indices = @transform_13, window_bounds = array<i64: 2>}, {transform_indices = @transform_14, window_bounds = array<i64: 1, 8>}]} {
    %c0 = arith.constant 0 : index
    %c0_0 = arith.constant 0 : index
    %c0_1 = arith.constant 0 : index
    %0 = vector.load %arg1[%c0, %c0_0, %c0_1] : memref<8x8x32xf32, #tpu.memory_space<vmem>>, vector<8x8x32xf32>
    %c0_2 = arith.constant 0 : index
    %c0_3 = arith.constant 0 : index
    %1 = vector.load %arg2[%c0_2, %c0_3] : memref<8x32xf32, #tpu.memory_space<vmem>>, vector<8x32xf32>
    %2 = vector.shape_cast %0 : vector<8x8x32xf32> to vector<64x32xf32>
    %3 = vector.shape_cast %1 : vector<8x32xf32> to vector<8x1x32xf32>
    %4 = vector.shape_cast %3 : vector<8x1x32xf32> to vector<8x1x32xf32>
    %5 = vector.broadcast %4 : vector<8x1x32xf32> to vector<8x8x32xf32>
    %6 = arith.mulf %0, %5 : vector<8x8x32xf32>
    %7 = vector.shape_cast %6 : vector<8x8x32xf32> to vector<64x32xf32>
    %c0_4 = arith.constant 0 : index
    %c0_5 = arith.constant 0 : index
    %8 = vector.load %arg3[%c0_4, %c0_5] : memref<32x32xf32, #tpu.memory_space<vmem>>, vector<32x32xf32>
    %cst = arith.constant dense<0.000000e+00> : vector<64x32xf32>
    %9 = tpu.matmul %2, %8, %cst {dimension_numbers = #tpu.dot_dimension_numbers<[1], [0], [0], [1], [0, 0, 1, 1], [], []>} : vector<64x32xf32>, vector<32x32xf32>, vector<64x32xf32> -> vector<64x32xf32>
    %c0_6 = arith.constant 0 : index
    %c0_7 = arith.constant 0 : index
    %10 = vector.load %arg4[%c0_6, %c0_7] : memref<32x32xf32, #tpu.memory_space<vmem>>, vector<32x32xf32>
    %cst_8 = arith.constant dense<0.000000e+00> : vector<64x32xf32>
    %11 = tpu.matmul %7, %10, %cst_8 {dimension_numbers = #tpu.dot_dimension_numbers<[1], [0], [0], [1], [0, 0, 1, 1], [], []>} : vector<64x32xf32>, vector<32x32xf32>, vector<64x32xf32> -> vector<64x32xf32>
    %12 = arith.addf %9, %11 : vector<64x32xf32>
    %13 = vector.shape_cast %12 : vector<64x32xf32> to vector<8x8x32xf32>
    %c0_9 = arith.constant 0 : index
    %c0_10 = arith.constant 0 : index
    %14 = vector.load %arg5[%c0_9, %c0_10] : memref<32x32xf32, #tpu.memory_space<vmem>>, vector<32x32xf32>
    %cst_11 = arith.constant dense<0.000000e+00> : vector<8x32xf32>
    %15 = tpu.matmul %1, %14, %cst_11 {dimension_numbers = #tpu.dot_dimension_numbers<[1], [0], [0], [1], [0, 0, 1, 1], [], []>} : vector<8x32xf32>, vector<32x32xf32>, vector<8x32xf32> -> vector<8x32xf32>
    %16 = vector.shape_cast %15 : vector<8x32xf32> to vector<8x1x32xf32>
    %17 = vector.broadcast %16 : vector<8x1x32xf32> to vector<8x8x32xf32>
    %18 = arith.addf %13, %17 : vector<8x8x32xf32>
    %c0_12 = arith.constant 0 : index
    %c0_13 = arith.constant 0 : index
    %19 = vector.load %arg6[%c0_12, %c0_13] : memref<1x32xf32, #tpu.memory_space<vmem>>, vector<1x32xf32>
    %20 = vector.shape_cast %19 : vector<1x32xf32> to vector<1x1x32xf32>
    %21 = vector.broadcast %20 : vector<1x1x32xf32> to vector<8x8x32xf32>
    %22 = arith.addf %18, %21 : vector<8x8x32xf32>
    %cst_14 = arith.constant 0.000000e+00 : f32
    %23 = vector.broadcast %cst_14 : f32 to vector<8x8x32xf32>
    %24 = arith.maximumf %22, %23 : vector<8x8x32xf32>
    %c0_15 = arith.constant 0 : index
    %c0_16 = arith.constant 0 : index
    %25 = vector.load %arg7[%c0_15, %c0_16] : memref<1x32xf32, #tpu.memory_space<vmem>>, vector<1x32xf32>
    %26 = vector.shape_cast %25 : vector<1x32xf32> to vector<1x1x32xf32>
    %27 = vector.broadcast %26 : vector<1x1x32xf32> to vector<8x8x32xf32>
    %28 = arith.mulf %24, %27 : vector<8x8x32xf32>
    %cst_17 = arith.constant dense<0.000000e+00> : vector<8x8xf32>
    %29 = vector.multi_reduction <add>, %28, %cst_17 [2] : vector<8x8x32xf32> to vector<8x8xf32>
    %c0_18 = arith.constant 0 : index
    %30 = memref.load %arg14[%c0_18] : memref<2xf32, #tpu.memory_space<smem>>
    %31 = vector.broadcast %30 : f32 to vector<8x8xf32>
    %32 = arith.addf %29, %31 : vector<8x8xf32>
    %33 = arith.negf %32 : vector<8x8xf32>
    %34 = math.exp %33 : vector<8x8xf32>
    %cst_19 = arith.constant 1.000000e+00 : f32
    %35 = vector.broadcast %cst_19 : f32 to vector<8x8xf32>
    %36 = arith.addf %35, %34 : vector<8x8xf32>
    %37 = arith.divf %35, %36 : vector<8x8xf32>
    %38 = vector.shape_cast %37 : vector<8x8xf32> to vector<8x8x1xf32>
    %39 = vector.broadcast %38 : vector<8x8x1xf32> to vector<8x8x32xf32>
    %40 = arith.mulf %39, %0 : vector<8x8x32xf32>
    %cst_20 = arith.constant dense<0.000000e+00> : vector<8x32xf32>
    %41 = vector.multi_reduction <add>, %40, %cst_20 [1] : vector<8x8x32xf32> to vector<8x32xf32>
    %c0_21 = arith.constant 0 : index
    %c0_22 = arith.constant 0 : index
    %42 = vector.load %arg8[%c0_21, %c0_22] : memref<32x128xf32, #tpu.memory_space<vmem>>, vector<32x128xf32>
    %cst_23 = arith.constant dense<0.000000e+00> : vector<8x128xf32>
    %43 = tpu.matmul %41, %42, %cst_23 {dimension_numbers = #tpu.dot_dimension_numbers<[1], [0], [0], [1], [0, 0, 1, 1], [], []>} : vector<8x32xf32>, vector<32x128xf32>, vector<8x128xf32> -> vector<8x128xf32>
    %c0_24 = arith.constant 0 : index
    %c0_25 = arith.constant 0 : index
    %44 = vector.load %arg9[%c0_24, %c0_25] : memref<32x128xf32, #tpu.memory_space<vmem>>, vector<32x128xf32>
    %cst_26 = arith.constant dense<0.000000e+00> : vector<8x128xf32>
    %45 = tpu.matmul %1, %44, %cst_26 {dimension_numbers = #tpu.dot_dimension_numbers<[1], [0], [0], [1], [0, 0, 1, 1], [], []>} : vector<8x32xf32>, vector<32x128xf32>, vector<8x128xf32> -> vector<8x128xf32>
    %46 = arith.addf %43, %45 : vector<8x128xf32>
    %c0_27 = arith.constant 0 : index
    %c0_28 = arith.constant 0 : index
    %47 = vector.load %arg10[%c0_27, %c0_28] : memref<1x128xf32, #tpu.memory_space<vmem>>, vector<1x128xf32>
    %48 = vector.broadcast %47 : vector<1x128xf32> to vector<8x128xf32>
    %49 = arith.addf %46, %48 : vector<8x128xf32>
    %cst_29 = arith.constant 0.000000e+00 : f32
    %50 = vector.broadcast %cst_29 : f32 to vector<8x128xf32>
    %51 = arith.maximumf %49, %50 : vector<8x128xf32>
    %c0_30 = arith.constant 0 : index
    %c0_31 = arith.constant 0 : index
    %52 = vector.load %arg11[%c0_30, %c0_31] : memref<128x64xf32, #tpu.memory_space<vmem>>, vector<128x64xf32>
    %cst_32 = arith.constant dense<0.000000e+00> : vector<8x64xf32>
    %53 = tpu.matmul %51, %52, %cst_32 {dimension_numbers = #tpu.dot_dimension_numbers<[1], [0], [0], [1], [0, 0, 1, 1], [], []>} : vector<8x128xf32>, vector<128x64xf32>, vector<8x64xf32> -> vector<8x64xf32>
    %c0_33 = arith.constant 0 : index
    %c0_34 = arith.constant 0 : index
    %54 = vector.load %arg12[%c0_33, %c0_34] : memref<1x64xf32, #tpu.memory_space<vmem>>, vector<1x64xf32>
    %55 = vector.broadcast %54 : vector<1x64xf32> to vector<8x64xf32>
    %56 = arith.addf %53, %55 : vector<8x64xf32>
    %cst_35 = arith.constant 0.000000e+00 : f32
    %57 = vector.broadcast %cst_35 : f32 to vector<8x64xf32>
    %58 = arith.maximumf %56, %57 : vector<8x64xf32>
    %c0_36 = arith.constant 0 : index
    %c0_37 = arith.constant 0 : index
    %59 = vector.load %arg13[%c0_36, %c0_37] : memref<1x64xf32, #tpu.memory_space<vmem>>, vector<1x64xf32>
    %60 = vector.broadcast %59 : vector<1x64xf32> to vector<8x64xf32>
    %61 = arith.mulf %58, %60 : vector<8x64xf32>
    %cst_38 = arith.constant dense<0.000000e+00> : vector<8xf32>
    %62 = vector.multi_reduction <add>, %61, %cst_38 [1] : vector<8x64xf32> to vector<8xf32>
    %c1 = arith.constant 1 : index
    %63 = memref.load %arg14[%c1] : memref<2xf32, #tpu.memory_space<smem>>
    %64 = vector.broadcast %63 : f32 to vector<8xf32>
    %65 = arith.addf %62, %64 : vector<8xf32>
    %66 = arith.negf %65 : vector<8xf32>
    %67 = math.exp %66 : vector<8xf32>
    %cst_39 = arith.constant 1.000000e+00 : f32
    %68 = vector.broadcast %cst_39 : f32 to vector<8xf32>
    %69 = arith.addf %68, %67 : vector<8xf32>
    %70 = arith.divf %68, %69 : vector<8xf32>
    %71 = vector.shape_cast %70 : vector<8xf32> to vector<1x8xf32>
    %c0_40 = arith.constant 0 : index
    %c0_41 = arith.constant 0 : index
    %72 = vector.load %arg15[%c0_40, %c0_41] : memref<1x8xf32, #tpu.memory_space<vmem>>, vector<1x8xf32>
    tpu.vector_store %arg15[%c0_40, %c0_41], %71 {strides = array<i32>} : memref<1x8xf32, #tpu.memory_space<vmem>>, vector<1x8xf32>,
    return
  }
  func.func @transform_0(%arg0: i32) -> (i32, i32, i32) {
    %c0_i32 = arith.constant 0 : i32
    %c0_i32_0 = arith.constant 0 : i32
    %c0_i32_1 = arith.constant 0 : i32
    return %arg0, %c0_i32, %c0_i32_0 : i32, i32, i32
  }
  func.func @transform_1(%arg0: i32) -> (i32, i32) {
    %c0_i32 = arith.constant 0 : i32
    %c0_i32_0 = arith.constant 0 : i32
    return %arg0, %c0_i32 : i32, i32
  }
  func.func @transform_2(%arg0: i32) -> (i32, i32) {
    %c0_i32 = arith.constant 0 : i32
    %c0_i32_0 = arith.constant 0 : i32
    %c0_i32_1 = arith.constant 0 : i32
    return %c0_i32, %c0_i32_0 : i32, i32
  }
  func.func @transform_3(%arg0: i32) -> (i32, i32) {
    %c0_i32 = arith.constant 0 : i32
    %c0_i32_0 = arith.constant 0 : i32
    %c0_i32_1 = arith.constant 0 : i32
    return %c0_i32, %c0_i32_0 : i32, i32
  }
  func.func @transform_4(%arg0: i32) -> (i32, i32) {
    %c0_i32 = arith.constant 0 : i32
    %c0_i32_0 = arith.constant 0 : i32
    %c0_i32_1 = arith.constant 0 : i32
    return %c0_i32, %c0_i32_0 : i32, i32
  }
  func.func @transform_5(%arg0: i32) -> (i32, i32) {
    %c0_i32 = arith.constant 0 : i32
    %c0_i32_0 = arith.constant 0 : i32
    %c0_i32_1 = arith.constant 0 : i32
    return %c0_i32, %c0_i32_0 : i32, i32
  }
  func.func @transform_6(%arg0: i32) -> (i32, i32) {
    %c0_i32 = arith.constant 0 : i32
    %c0_i32_0 = arith.constant 0 : i32
    %c0_i32_1 = arith.constant 0 : i32
    return %c0_i32, %c0_i32_0 : i32, i32
  }
  func.func @transform_7(%arg0: i32) -> (i32, i32) {
    %c0_i32 = arith.constant 0 : i32
    %c0_i32_0 = arith.constant 0 : i32
    %c0_i32_1 = arith.constant 0 : i32
    return %c0_i32, %c0_i32_0 : i32, i32
  }
  func.func @transform_8(%arg0: i32) -> (i32, i32) {
    %c0_i32 = arith.constant 0 : i32
    %c0_i32_0 = arith.constant 0 : i32
    %c0_i32_1 = arith.constant 0 : i32
    return %c0_i32, %c0_i32_0 : i32, i32
  }
  func.func @transform_9(%arg0: i32) -> (i32, i32) {
    %c0_i32 = arith.constant 0 : i32
    %c0_i32_0 = arith.constant 0 : i32
    %c0_i32_1 = arith.constant 0 : i32
    return %c0_i32, %c0_i32_0 : i32, i32
  }
  func.func @transform_10(%arg0: i32) -> (i32, i32) {
    %c0_i32 = arith.constant 0 : i32
    %c0_i32_0 = arith.constant 0 : i32
    %c0_i32_1 = arith.constant 0 : i32
    return %c0_i32, %c0_i32_0 : i32, i32
  }
  func.func @transform_11(%arg0: i32) -> (i32, i32) {
    %c0_i32 = arith.constant 0 : i32
    %c0_i32_0 = arith.constant 0 : i32
    %c0_i32_1 = arith.constant 0 : i32
    return %c0_i32, %c0_i32_0 : i32, i32
  }
  func.func @transform_12(%arg0: i32) -> (i32, i32) {
    %c0_i32 = arith.constant 0 : i32
    %c0_i32_0 = arith.constant 0 : i32
    %c0_i32_1 = arith.constant 0 : i32
    return %c0_i32, %c0_i32_0 : i32, i32
  }
  func.func @transform_13(%arg0: i32) -> i32 {
    %c0_i32 = arith.constant 0 : i32
    %c0_i32_0 = arith.constant 0 : i32
    return %c0_i32 : i32
  }
  func.func @transform_14(%arg0: i32) -> (i32, i32) {
    %c0_i32 = arith.constant 0 : i32
    %c0_i32_0 = arith.constant 0 : i32
    return %arg0, %c0_i32 : i32, i32
  }
}

</mosaic_0001>

<llo_original>
// kernel: tpu_custom_call.1
$region0: #{tpu_custom_call.1}
  #allocation0 [shape = 'u32[]', space=smem, size = 0x4, offset = 0x4, fixed_abs, tag = 'smem constant byte address 0x4 - core index']
  #allocation1 [shape = 'u32[144,128]{1,0:T(1,128)}', space=vmem, size = 0x12000, scoped, tag = 'internal scratch']
  %s0 = inlined_call_operand.vmem [shape: f32[8,8,32], index: 0, kind: input, shape index: {}]
  %s1 = inlined_call_operand.hbm [shape: f32[8,32], index: 1, kind: input, shape index: {}]
  %s2 = inlined_call_operand.vmem [shape: f32[32,32], index: 2, kind: input, shape index: {}]
  %s3 = inlined_call_operand.vmem [shape: f32[32,32], index: 3, kind: input, shape index: {}]
  %s4 = inlined_call_operand.vmem [shape: f32[32,32], index: 4, kind: input, shape index: {}]
  %s5 = inlined_call_operand.vmem [shape: f32[1,32], index: 5, kind: input, shape index: {}]
  %s6 = inlined_call_operand.vmem [shape: f32[1,32], index: 6, kind: input, shape index: {}]
  %s7 = inlined_call_operand.vmem [shape: f32[32,128], index: 7, kind: input, shape index: {}]
  %s8 = inlined_call_operand.hbm [shape: f32[32,128], index: 8, kind: input, shape index: {}]
  %s9 = inlined_call_operand.vmem [shape: f32[1,128], index: 9, kind: input, shape index: {}]
  %s10 = inlined_call_operand.vmem [shape: f32[128,64], index: 10, kind: input, shape index: {}]
  %s11 = inlined_call_operand.vmem [shape: f32[1,64], index: 11, kind: input, shape index: {}]
  %s12 = inlined_call_operand.vmem [shape: f32[1,64], index: 12, kind: input, shape index: {}]
  %s13 = inlined_call_operand.vmem [shape: f32[2], index: 13, kind: input, shape index: {}]
  %s14 = inlined_call_operand.hbm [shape: f32[1,8], index: 14, kind: output, shape index: {}]
  %s15 = sld [smem:[#allocation0]]
  $region78: #{tpu_custom_call.1} parent=0
    _
  %s17 = ssub.s32 1, %s15
  %s18 = scalar_select 0, %s17, %s15
  $region1: #{tpu_custom_call.1} parent=0
    #allocation2 [shape = 'u8[4096]{0}', space=vmem, size = 0x1000, scoped, tag = 'input window, operand 1, single buffered']
    #allocation3 [shape = 's32[1]{0}', space=sflag, size = 0x4, scoped, tag = 'scoped memory for tpu_custom_call.1']
    #allocation4 [shape = 's32[1]{0}', space=sflag, size = 0x4, scoped, tag = 'scoped memory for tpu_custom_call.1']
    #allocation5 [shape = 's32[1]{0}', space=sflag, size = 0x4, scoped, tag = 'scoped memory for tpu_custom_call.1']
    #allocation6 [shape = 'u8[16384]{0}', space=vmem, size = 0x4000, scoped, tag = 'input window, operand 8, single buffered']
    #allocation7 [shape = 's32[1]{0}', space=sflag, size = 0x4, scoped, tag = 'scoped memory for tpu_custom_call.1']
    #allocation8 [shape = 'u8[512]{0}', space=smem, size = 0x200, scoped, tag = 'input window, operand 13, single buffered']
    #allocation9 [shape = 'u8[512]{0}', space=vmem, size = 0x400, scoped, tag = 'output window, operand 0, single buffered']
    %19 = vsyncpa [#allocation3], 0
    %20 = vsyncpa [#allocation7], 0
    %21 = vsyncpa [#allocation5], 0
    %22 = vsyncpa [#allocation4], 0
    // Predicated region
    $region2: #{tpu_custom_call.1} parent=1 // pred_check
      _
    $region3: #{tpu_custom_call.1} parent=1 // pred_check_branch
      %24 = sbr.rel (0) target = $region5
    $region4: #{tpu_custom_call.1} parent=1 // pred_region
      _
    $region5: #{tpu_custom_call.1} parent=1 // pred_fallthru
      _
    // Predicated region
    $region6: #{tpu_custom_call.1} parent=1 // pred_check
      _
    $region7: #{tpu_custom_call.1} parent=1 // pred_check_branch
      %26 = sbr.rel (0) target = $region9
    $region8: #{tpu_custom_call.1} parent=1 // pred_region
      %s28 = ssub.s32 128, 128
      %29 = vsyncadd [#allocation3], %s28
      %s31 = sshll.u32 [#allocation2], 4
      %s32 = int_to_ptr.vmem [resolvable:$true] %s31
      %34 = dma.hbm_to_vmem [thread:$0]  %s1, 128, %s32, [#allocation3]
    $region9: #{tpu_custom_call.1} parent=1 // pred_fallthru
      _
    // Predicated region
    $region10: #{tpu_custom_call.1} parent=1 // pred_check
      _
    $region11: #{tpu_custom_call.1} parent=1 // pred_check_branch
      %36 = sbr.rel (0) target = $region13
    $region12: #{tpu_custom_call.1} parent=1 // pred_region
      _
    $region13: #{tpu_custom_call.1} parent=1 // pred_fallthru
      _
    // Predicated region
    $region14: #{tpu_custom_call.1} parent=1 // pred_check
      _
    $region15: #{tpu_custom_call.1} parent=1 // pred_check_branch
      %38 = sbr.rel (0) target = $region17
    $region16: #{tpu_custom_call.1} parent=1 // pred_region
      _
    $region17: #{tpu_custom_call.1} parent=1 // pred_fallthru
      _
    // Predicated region
    $region18: #{tpu_custom_call.1} parent=1 // pred_check
      _
    $region19: #{tpu_custom_call.1} parent=1 // pred_check_branch
      %40 = sbr.rel (0) target = $region21
    $region20: #{tpu_custom_call.1} parent=1 // pred_region
      _
    $region21: #{tpu_custom_call.1} parent=1 // pred_fallthru
      _
    // Predicated region
    $region22: #{tpu_custom_call.1} parent=1 // pred_check
      _
    $region23: #{tpu_custom_call.1} parent=1 // pred_check_branch
      %42 = sbr.rel (0) target = $region25
    $region24: #{tpu_custom_call.1} parent=1 // pred_region
      _
    $region25: #{tpu_custom_call.1} parent=1 // pred_fallthru
      _
    // Predicated region
    $region26: #{tpu_custom_call.1} parent=1 // pred_check
      _
    $region27: #{tpu_custom_call.1} parent=1 // pred_check_branch
      %44 = sbr.rel (0) target = $region29
    $region28: #{tpu_custom_call.1} parent=1 // pred_region
      _
    $region29: #{tpu_custom_call.1} parent=1 // pred_fallthru
      _
    // Predicated region
    $region30: #{tpu_custom_call.1} parent=1 // pred_check
      _
    $region31: #{tpu_custom_call.1} parent=1 // pred_check_branch
      %46 = sbr.rel (0) target = $region33
    $region32: #{tpu_custom_call.1} parent=1 // pred_region
      _
    $region33: #{tpu_custom_call.1} parent=1 // pred_fallthru
      _
    // Predicated region
    $region34: #{tpu_custom_call.1} parent=1 // pred_check
      _
    $region35: #{tpu_custom_call.1} parent=1 // pred_check_branch
      %48 = sbr.rel (0) target = $region37
    $region36: #{tpu_custom_call.1} parent=1 // pred_region
      %s50 = ssub.s32 512, 512
      %51 = vsyncadd [#allocation7], %s50
      %s52 = sshll.u32 [#allocation6], 4
      %s53 = int_to_ptr.vmem [resolvable:$true] %s52
      %58 = dma.hbm_to_vmem [thread:$0]  %s8, 512, %s53, [#allocation7], 128, 128, 8
    $region37: #{tpu_custom_call.1} parent=1 // pred_fallthru
      _
    // Predicated region
    $region38: #{tpu_custom_call.1} parent=1 // pred_check
      _
    $region39: #{tpu_custom_call.1} parent=1 // pred_check_branch
      %60 = sbr.rel (0) target = $region41
    $region40: #{tpu_custom_call.1} parent=1 // pred_region
      _
    $region41: #{tpu_custom_call.1} parent=1 // pred_fallthru
      _
    // Predicated region
    $region42: #{tpu_custom_call.1} parent=1 // pred_check
      _
    $region43: #{tpu_custom_call.1} parent=1 // pred_check_branch
      %62 = sbr.rel (0) target = $region45
    $region44: #{tpu_custom_call.1} parent=1 // pred_region
      _
    $region45: #{tpu_custom_call.1} parent=1 // pred_fallthru
      _
    // Predicated region
    $region46: #{tpu_custom_call.1} parent=1 // pred_check
      _
    $region47: #{tpu_custom_call.1} parent=1 // pred_check_branch
      %64 = sbr.rel (0) target = $region49
    $region48: #{tpu_custom_call.1} parent=1 // pred_region
      _
    $region49: #{tpu_custom_call.1} parent=1 // pred_fallthru
      _
    // Predicated region
    $region50: #{tpu_custom_call.1} parent=1 // pred_check
      _
    $region51: #{tpu_custom_call.1} parent=1 // pred_check_branch
      %66 = sbr.rel (0) target = $region53
    $region52: #{tpu_custom_call.1} parent=1 // pred_region
      _
    $region53: #{tpu_custom_call.1} parent=1 // pred_fallthru
      _
    // Predicated region
    $region54: #{tpu_custom_call.1} parent=1 // pred_check
      _
    $region55: #{tpu_custom_call.1} parent=1 // pred_check_branch
      %68 = sbr.rel (0) target = $region57
    $region56: #{tpu_custom_call.1} parent=1 // pred_region
      %s70 = ssub.s32 16, 16
      %71 = vsyncadd [#allocation5], %s70
      %s73 = sshll.u32 %s13, 4
      %s74 = int_to_ptr.vmem [resolvable:$true] %s73
      %76 = dma.vmem_to_smem %s74, 16, [#allocation8], [#allocation5]
    $region57: #{tpu_custom_call.1} parent=1 // pred_fallthru
      _
    // Predicated region
    $region58: #{tpu_custom_call.1} parent=1 // pred_check
      _
    $region59: #{tpu_custom_call.1} parent=1 // pred_check_branch
      %78 = sbr.rel (0) target = $region61
    $region60: #{tpu_custom_call.1} parent=1 // pred_region
      %79 = dma.done [#allocation3], 128
    $region61: #{tpu_custom_call.1} parent=1 // pred_fallthru
      _
    // Predicated region
    $region62: #{tpu_custom_call.1} parent=1 // pred_check
      _
    $region63: #{tpu_custom_call.1} parent=1 // pred_check_branch
      %81 = sbr.rel (0) target = $region65
    $region64: #{tpu_custom_call.1} parent=1 // pred_region
      %82 = dma.done [#allocation7], 512
    $region65: #{tpu_custom_call.1} parent=1 // pred_fallthru
      _
    // Predicated region
    $region66: #{tpu_custom_call.1} parent=1 // pred_check
      _
    $region67: #{tpu_custom_call.1} parent=1 // pred_check_branch
      %84 = sbr.rel (0) target = $region69
    $region68: #{tpu_custom_call.1} parent=1 // pred_region
      %85 = dma.done [#allocation5], 16
    $region69: #{tpu_custom_call.1} parent=1 // pred_fallthru
      _
    %86 = sfence
    %v87 = vld [vmem:[%s0] sm:$0xff]
    %v88 = vld [vmem:[%s0 + $0x8] sm:$0xff]
    %v89 = vld [vmem:[%s0 + $0x10] sm:$0xff]
    %v90 = vld [vmem:[%s0 + $0x18] sm:$0xff]
    %v91 = vld [vmem:[%s0 + $0x20] sm:$0xff]
    %v92 = vld [vmem:[%s0 + $0x28] sm:$0xff]
    %v93 = vld [vmem:[%s0 + $0x30] sm:$0xff]
    %v94 = vld [vmem:[%s0 + $0x38] sm:$0xff]
    %v95 = vld [vmem:[#allocation2] sm:$0xff]
    %v97 = vcombine.high %v95, %v95
    %v99 = vunpack.c.l.s4 1966171168
    %v100 = vunpack.c.0.s8 %v99
    %v101 = vlaneseq
    %v102 = vshrl.u32 %v101, 7
    %v103 = vsub.s32 %v100, %v102
    %v104 = vrot.slane %v95, %v103
    %v106 = vunpack.c.l.s4 1966171168
    %v107 = vunpack.c.0.s8 %v106
    %v108 = vlaneseq
    %v109 = vshrl.u32 %v108, 7
    %v110 = vsub.s32 %v107, %v109
    %v111 = vrot.slane %v97, %v110
    %v112 = vcombine.high %v104, %v104
    %v113 = vcombine.high %v111, %v111
    %v115 = vunpack.c.l.s4 1966171168
    %v116 = vunpack.c.0.s8 %v115
    %v117 = vlaneseq
    %v118 = vshrl.u32 %v117, 7
    %v119 = vsub.s32 %v116, %v118
    %v120 = vrot.slane %v104, %v119
    %v122 = vunpack.c.l.s4 1966171168
    %v123 = vunpack.c.0.s8 %v122
    %v124 = vlaneseq
    %v125 = vshrl.u32 %v124, 7
    %v126 = vsub.s32 %v123, %v125
    %v127 = vrot.slane %v111, %v126
    %v129 = vunpack.c.l.s4 1966171168
    %v130 = vunpack.c.0.s8 %v129
    %v131 = vlaneseq
    %v132 = vshrl.u32 %v131, 7
    %v133 = vsub.s32 %v130, %v132
    %v134 = vrot.slane %v112, %v133
    %v136 = vunpack.c.l.s4 1966171168
    %v137 = vunpack.c.0.s8 %v136
    %v138 = vlaneseq
    %v139 = vshrl.u32 %v138, 7
    %v140 = vsub.s32 %v137, %v139
    %v141 = vrot.slane %v113, %v140
    %v142 = vcombine.high %v120, %v120
    %v143 = vcombine.high %v127, %v127
    %v144 = vcombine.high %v134, %v134
    %v145 = vcombine.high %v141, %v141
    %v146 = vlaneseq
    %v147 = vshrl.u32 %v146, 7
    %v148 = vsub.s32 0, %v147
    %v149 = vrot.slane %v120, %v148
    %v150 = vlaneseq
    %v151 = vshrl.u32 %v150, 7
    %v152 = vsub.s32 0, %v151
    %v153 = vrot.slane %v134, %v152
    %v154 = vlaneseq
    %v155 = vshrl.u32 %v154, 7
    %v156 = vsub.s32 0, %v155
    %v157 = vrot.slane %v142, %v156
    %v158 = vlaneseq
    %v159 = vshrl.u32 %v158, 7
    %v160 = vsub.s32 0, %v159
    %v161 = vrot.slane %v144, %v160
    %v162 = vlaneseq
    %v163 = vshrl.u32 %v162, 7
    %v164 = vsub.s32 0, %v163
    %v165 = vrot.slane %v127, %v164
    %v166 = vlaneseq
    %v167 = vshrl.u32 %v166, 7
    %v168 = vsub.s32 0, %v167
    %v169 = vrot.slane %v141, %v168
    %v170 = vlaneseq
    %v171 = vshrl.u32 %v170, 7
    %v172 = vsub.s32 0, %v171
    %v173 = vrot.slane %v143, %v172
    %v174 = vlaneseq
    %v175 = vshrl.u32 %v174, 7
    %v176 = vsub.s32 0, %v175
    %v177 = vrot.slane %v145, %v176
    %v186 = vmul.f32 %v87, %v149
    %v187 = vmul.f32 %v88, %v153
    %v188 = vmul.f32 %v89, %v157
    %v189 = vmul.f32 %v90, %v161
    %v190 = vmul.f32 %v91, %v165
    %v191 = vmul.f32 %v92, %v169
    %v192 = vmul.f32 %v93, %v173
    %v193 = vmul.f32 %v94, %v177
    %v194 = vld [vmem:[%s2] sm:$0xff]
    %v195 = vld [vmem:[%s2 + $0x8] sm:$0xff]
    %v196 = vld [vmem:[%s2 + $0x10] sm:$0xff]
    %v197 = vld [vmem:[%s2 + $0x18] sm:$0xff]
    %v198 = vld [vmem:[%s3] sm:$0xff]
    %v199 = vld [vmem:[%s3 + $0x8] sm:$0xff]
    %v200 = vld [vmem:[%s3 + $0x10] sm:$0xff]
    %v201 = vld [vmem:[%s3 + $0x18] sm:$0xff]
    %vm202 = vcmask 261120
    %v204 = vsel %vm202, %v186, 0
    %v207 = vsel %vm202, %v187, 0
    %v210 = vsel %vm202, %v188, 0
    %v213 = vsel %vm202, %v189, 0
    %v216 = vsel %vm202, %v190, 0
    %v219 = vsel %vm202, %v191, 0
    %v222 = vsel %vm202, %v192, 0
    %v225 = vsel %vm202, %v193, 0
    %227 = vmatprep.subr.mxu0 0.0
    %228 = vmatpush1.msra.mxu0 0.0
    %229 = vmatprep.subr.mxu0 0.0
    %230 = vmatpush1.msra.mxu0 0.0
    %231 = vmatprep.subr.mxu0 0.0
    %232 = vmatpush1.msra.mxu0 0.0
    %233 = vmatprep.subr.mxu0 0.0
    %234 = vmatpush1.msra.mxu0 0.0
    %235 = vmatprep.subr.mxu0 0.0
    %236 = vmatpush1.msra.mxu0 0.0
    %237 = vmatprep.subr.mxu0 0.0
    %238 = vmatpush1.msra.mxu0 0.0
    %239 = vmatprep.subr.mxu0 0.0
    %240 = vmatpush1.msra.mxu0 0.0
    %241 = vmatprep.subr.mxu0 0.0
    %242 = vmatpush1.msra.mxu0 0.0
    %243 = vmatprep.subr.mxu0 0.0
    %244 = vmatpush1.msra.mxu0 0.0
    %245 = vmatprep.subr.mxu0 0.0
    %246 = vmatpush1.msra.mxu0 0.0
    %247 = vmatprep.subr.mxu0 0.0
    %248 = vmatpush1.msra.mxu0 0.0
    %249 = vmatprep.subr.mxu0 0.0
    %250 = vmatpush1.msra.mxu0 0.0
    %251 = vmatprep.subr.mxu0 0.0
    %252 = vmatpush1.msra.mxu0 %v201
    %253 = vmatprep.subr.mxu0 0.0
    %254 = vmatpush1.msra.mxu0 %v200
    %255 = vmatprep.subr.mxu0 0.0
    %256 = vmatpush1.msra.mxu0 %v199
    %257 = vmatprep.subr.mxu0 0.0
    %258 = vmatpush1.msra.mxu0 %v198
    %259 = vmatprep.subr.mxu0 0.0
    %260 = vmatpush2.msra.mxu0 0.0
    %261 = vmatprep.subr.mxu0 0.0
    %262 = vmatpush2.msra.mxu0 0.0
    %263 = vmatprep.subr.mxu0 0.0
    %264 = vmatpush2.msra.mxu0 0.0
    %265 = vmatprep.subr.mxu0 0.0
    %266 = vmatpush2.msra.mxu0 0.0
    %267 = vmatprep.subr.mxu0 0.0
    %268 = vmatpush2.msra.mxu0 0.0
    %269 = vmatprep.subr.mxu0 0.0
    %270 = vmatpush2.msra.mxu0 0.0
    %271 = vmatprep.subr.mxu0 0.0
    %272 = vmatpush2.msra.mxu0 0.0
    %273 = vmatprep.subr.mxu0 0.0
    %274 = vmatpush2.msra.mxu0 0.0
    %275 = vmatprep.subr.mxu0 0.0
    %276 = vmatpush2.msra.mxu0 0.0
    %277 = vmatprep.subr.mxu0 0.0
    %278 = vmatpush2.msra.mxu0 0.0
    %279 = vmatprep.subr.mxu0 0.0
    %280 = vmatpush2.msra.mxu0 0.0
    %281 = vmatprep.subr.mxu0 0.0
    %282 = vmatpush2.msra.mxu0 0.0
    %283 = vmatprep.subr.mxu0 0.0
    %284 = vmatpush2.msra.mxu0 0.0
    %285 = vmatprep.subr.mxu0 0.0
    %286 = vmatpush2.msra.mxu0 0.0
    %287 = vmatprep.subr.mxu0 0.0
    %288 = vmatpush2.msra.mxu0 0.0
    %289 = vmatprep.subr.mxu0 0.0
    %290 = vmatpush2.msra.mxu0 0.0
    %291 = vmatprep.mubr.f32.mxu0 0.0
    %292 = vmatmul.mubr.f32.gmra.mxu0 %v204
    %v293 = vpop.f32.mrf.mxu0
    %v294 = vadd.f32 0.0, %v293
    %v295 = vpop.f32.mrf.mxu0
    %296 = vmatprep.mubr.f32.mxu0 0.0
    %297 = vmatmul.mubr.f32.gmra.mxu0 %v207
    %v298 = vpop.f32.mrf.mxu0
    %v299 = vadd.f32 0.0, %v298
    %v300 = vpop.f32.mrf.mxu0
    %301 = vmatprep.mubr.f32.mxu0 0.0
    %302 = vmatmul.mubr.f32.gmra.mxu0 %v210
    %v303 = vpop.f32.mrf.mxu0
    %v304 = vadd.f32 0.0, %v303
    %v305 = vpop.f32.mrf.mxu0
    %306 = vmatprep.mubr.f32.mxu0 0.0
    %307 = vmatmul.mubr.f32.gmra.mxu0 %v213
    %v308 = vpop.f32.mrf.mxu0
    %v309 = vadd.f32 0.0, %v308
    %v310 = vpop.f32.mrf.mxu0
    %311 = vmatprep.mubr.f32.mxu0 0.0
    %312 = vmatmul.mubr.f32.gmra.mxu0 %v216
    %v313 = vpop.f32.mrf.mxu0
    %v314 = vadd.f32 0.0, %v313
    %v315 = vpop.f32.mrf.mxu0
    %316 = vmatprep.mubr.f32.mxu0 0.0
    %317 = vmatmul.mubr.f32.gmra.mxu0 %v219
    %v318 = vpop.f32.mrf.mxu0
    %v319 = vadd.f32 0.0, %v318
    %v320 = vpop.f32.mrf.mxu0
    %321 = vmatprep.mubr.f32.mxu0 0.0
    %322 = vmatmul.mubr.f32.gmra.mxu0 %v222
    %v323 = vpop.f32.mrf.mxu0
    %v324 = vadd.f32 0.0, %v323
    %v325 = vpop.f32.mrf.mxu0
    %326 = vmatprep.mubr.f32.mxu0 0.0
    %327 = vmatmul.mubr.f32.gmra.mxu0 %v225
    %v328 = vpop.f32.mrf.mxu0
    %v329 = vadd.f32 0.0, %v328
    %v330 = vpop.f32.mrf.mxu0
    %331 = vdwg.mxu0
    %v333 = vsel %vm202, %v87, 0
    %v336 = vsel %vm202, %v88, 0
    %v339 = vsel %vm202, %v89, 0
    %v342 = vsel %vm202, %v90, 0
    %v345 = vsel %vm202, %v91, 0
    %v348 = vsel %vm202, %v92, 0
    %v351 = vsel %vm202, %v93, 0
    %v354 = vsel %vm202, %v94, 0
    %356 = vmatprep.subr.mxu0 0.0
    %357 = vmatpush1.msra.mxu0 0.0
    %358 = vmatprep.subr.mxu0 0.0
    %359 = vmatpush1.msra.mxu0 0.0
    %360 = vmatprep.subr.mxu0 0.0
    %361 = vmatpush1.msra.mxu0 0.0
    %362 = vmatprep.subr.mxu0 0.0
    %363 = vmatpush1.msra.mxu0 0.0
    %364 = vmatprep.subr.mxu0 0.0
    %365 = vmatpush1.msra.mxu0 0.0
    %366 = vmatprep.subr.mxu0 0.0
    %367 = vmatpush1.msra.mxu0 0.0
    %368 = vmatprep.subr.mxu0 0.0
    %369 = vmatpush1.msra.mxu0 0.0
    %370 = vmatprep.subr.mxu0 0.0
    %371 = vmatpush1.msra.mxu0 0.0
    %372 = vmatprep.subr.mxu0 0.0
    %373 = vmatpush1.msra.mxu0 0.0
    %374 = vmatprep.subr.mxu0 0.0
    %375 = vmatpush1.msra.mxu0 0.0
    %376 = vmatprep.subr.mxu0 0.0
    %377 = vmatpush1.msra.mxu0 0.0
    %378 = vmatprep.subr.mxu0 0.0
    %379 = vmatpush1.msra.mxu0 0.0
    %380 = vmatprep.subr.mxu0 0.0
    %381 = vmatpush1.msra.mxu0 %v197
    %382 = vmatprep.subr.mxu0 0.0
    %383 = vmatpush1.msra.mxu0 %v196
    %384 = vmatprep.subr.mxu0 0.0
    %385 = vmatpush1.msra.mxu0 %v195
    %386 = vmatprep.subr.mxu0 0.0
    %387 = vmatpush1.msra.mxu0 %v194
    %388 = vmatprep.subr.mxu0 0.0
    %389 = vmatpush2.msra.mxu0 0.0
    %390 = vmatprep.subr.mxu0 0.0
    %391 = vmatpush2.msra.mxu0 0.0
    %392 = vmatprep.subr.mxu0 0.0
    %393 = vmatpush2.msra.mxu0 0.0
    %394 = vmatprep.subr.mxu0 0.0
    %395 = vmatpush2.msra.mxu0 0.0
    %396 = vmatprep.subr.mxu0 0.0
    %397 = vmatpush2.msra.mxu0 0.0
    %398 = vmatprep.subr.mxu0 0.0
    %399 = vmatpush2.msra.mxu0 0.0
    %400 = vmatprep.subr.mxu0 0.0
    %401 = vmatpush2.msra.mxu0 0.0
    %402 = vmatprep.subr.mxu0 0.0
    %403 = vmatpush2.msra.mxu0 0.0
    %404 = vmatprep.subr.mxu0 0.0
    %405 = vmatpush2.msra.mxu0 0.0
    %406 = vmatprep.subr.mxu0 0.0
    %407 = vmatpush2.msra.mxu0 0.0
    %408 = vmatprep.subr.mxu0 0.0
    %409 = vmatpush2.msra.mxu0 0.0
    %410 = vmatprep.subr.mxu0 0.0
    %411 = vmatpush2.msra.mxu0 0.0
    %412 = vmatprep.subr.mxu0 0.0
    %413 = vmatpush2.msra.mxu0 0.0
    %414 = vmatprep.subr.mxu0 0.0
    %415 = vmatpush2.msra.mxu0 0.0
    %416 = vmatprep.subr.mxu0 0.0
    %417 = vmatpush2.msra.mxu0 0.0
    %418 = vmatprep.subr.mxu0 0.0
    %419 = vmatpush2.msra.mxu0 0.0
    %420 = vmatprep.mubr.f32.mxu0 0.0
    %421 = vmatmul.mubr.f32.gmra.mxu0 %v333
    %v422 = vpop.f32.mrf.mxu0
    %v423 = vadd.f32 %v294, %v422
    %v424 = vpop.f32.mrf.mxu0
    %425 = vmatprep.mubr.f32.mxu0 0.0
    %426 = vmatmul.mubr.f32.gmra.mxu0 %v336
    %v427 = vpop.f32.mrf.mxu0
    %v428 = vadd.f32 %v299, %v427
    %v429 = vpop.f32.mrf.mxu0
    %430 = vmatprep.mubr.f32.mxu0 0.0
    %431 = vmatmul.mubr.f32.gmra.mxu0 %v339
    %v432 = vpop.f32.mrf.mxu0
    %v433 = vadd.f32 %v304, %v432
    %v434 = vpop.f32.mrf.mxu0
    %435 = vmatprep.mubr.f32.mxu0 0.0
    %436 = vmatmul.mubr.f32.gmra.mxu0 %v342
    %v437 = vpop.f32.mrf.mxu0
    %v438 = vadd.f32 %v309, %v437
    %v439 = vpop.f32.mrf.mxu0
    %440 = vmatprep.mubr.f32.mxu0 0.0
    %441 = vmatmul.mubr.f32.gmra.mxu0 %v345
    %v442 = vpop.f32.mrf.mxu0
    %v443 = vadd.f32 %v314, %v442
    %v444 = vpop.f32.mrf.mxu0
    %445 = vmatprep.mubr.f32.mxu0 0.0
    %446 = vmatmul.mubr.f32.gmra.mxu0 %v348
    %v447 = vpop.f32.mrf.mxu0
    %v448 = vadd.f32 %v319, %v447
    %v449 = vpop.f32.mrf.mxu0
    %450 = vmatprep.mubr.f32.mxu0 0.0
    %451 = vmatmul.mubr.f32.gmra.mxu0 %v351
    %v452 = vpop.f32.mrf.mxu0
    %v453 = vadd.f32 %v324, %v452
    %v454 = vpop.f32.mrf.mxu0
    %455 = vmatprep.mubr.f32.mxu0 0.0
    %456 = vmatmul.mubr.f32.gmra.mxu0 %v354
    %v457 = vpop.f32.mrf.mxu0
    %v458 = vadd.f32 %v329, %v457
    %v459 = vpop.f32.mrf.mxu0
    %460 = vdwg.mxu0
    %v461 = vld [vmem:[%s4] sm:$0xff]
    %v462 = vld [vmem:[%s4 + $0x8] sm:$0xff]
    %v463 = vld [vmem:[%s4 + $0x10] sm:$0xff]
    %v464 = vld [vmem:[%s4 + $0x18] sm:$0xff]
    %v465 = vsel %vm202, %v95, 0
    %467 = vmatprep.subr.mxu0 0.0
    %468 = vmatpush1.msra.mxu0 0.0
    %469 = vmatprep.subr.mxu0 0.0
    %470 = vmatpush1.msra.mxu0 0.0
    %471 = vmatprep.subr.mxu0 0.0
    %472 = vmatpush1.msra.mxu0 0.0
    %473 = vmatprep.subr.mxu0 0.0
    %474 = vmatpush1.msra.mxu0 0.0
    %475 = vmatprep.subr.mxu0 0.0
    %476 = vmatpush1.msra.mxu0 0.0
    %477 = vmatprep.subr.mxu0 0.0
    %478 = vmatpush1.msra.mxu0 0.0
    %479 = vmatprep.subr.mxu0 0.0
    %480 = vmatpush1.msra.mxu0 0.0
    %481 = vmatprep.subr.mxu0 0.0
    %482 = vmatpush1.msra.mxu0 0.0
    %483 = vmatprep.subr.mxu0 0.0
    %484 = vmatpush1.msra.mxu0 0.0
    %485 = vmatprep.subr.mxu0 0.0
    %486 = vmatpush1.msra.mxu0 0.0
    %487 = vmatprep.subr.mxu0 0.0
    %488 = vmatpush1.msra.mxu0 0.0
    %489 = vmatprep.subr.mxu0 0.0
    %490 = vmatpush1.msra.mxu0 0.0
    %491 = vmatprep.subr.mxu0 0.0
    %492 = vmatpush1.msra.mxu0 %v464
    %493 = vmatprep.subr.mxu0 0.0
    %494 = vmatpush1.msra.mxu0 %v463
    %495 = vmatprep.subr.mxu0 0.0
    %496 = vmatpush1.msra.mxu0 %v462
    %497 = vmatprep.subr.mxu0 0.0
    %498 = vmatpush1.msra.mxu0 %v461
    %499 = vmatprep.subr.mxu0 0.0
    %500 = vmatpush2.msra.mxu0 0.0
    %501 = vmatprep.subr.mxu0 0.0
    %502 = vmatpush2.msra.mxu0 0.0
    %503 = vmatprep.subr.mxu0 0.0
    %504 = vmatpush2.msra.mxu0 0.0
    %505 = vmatprep.subr.mxu0 0.0
    %506 = vmatpush2.msra.mxu0 0.0
    %507 = vmatprep.subr.mxu0 0.0
    %508 = vmatpush2.msra.mxu0 0.0
    %509 = vmatprep.subr.mxu0 0.0
    %510 = vmatpush2.msra.mxu0 0.0
    %511 = vmatprep.subr.mxu0 0.0
    %512 = vmatpush2.msra.mxu0 0.0
    %513 = vmatprep.subr.mxu0 0.0
    %514 = vmatpush2.msra.mxu0 0.0
    %515 = vmatprep.subr.mxu0 0.0
    %516 = vmatpush2.msra.mxu0 0.0
    %517 = vmatprep.subr.mxu0 0.0
    %518 = vmatpush2.msra.mxu0 0.0
    %519 = vmatprep.subr.mxu0 0.0
    %520 = vmatpush2.msra.mxu0 0.0
    %521 = vmatprep.subr.mxu0 0.0
    %522 = vmatpush2.msra.mxu0 0.0
    %523 = vmatprep.subr.mxu0 0.0
    %524 = vmatpush2.msra.mxu0 0.0
    %525 = vmatprep.subr.mxu0 0.0
    %526 = vmatpush2.msra.mxu0 0.0
    %527 = vmatprep.subr.mxu0 0.0
    %528 = vmatpush2.msra.mxu0 0.0
    %529 = vmatprep.subr.mxu0 0.0
    %530 = vmatpush2.msra.mxu0 0.0
    %531 = vmatprep.mubr.f32.mxu0 0.0
    %532 = vmatmul.mubr.f32.gmra.mxu0 %v465
    %v533 = vpop.f32.mrf.mxu0
    %v534 = vadd.f32 0.0, %v533
    %v535 = vpop.f32.mrf.mxu0
    %536 = vdwg.mxu0
    %v538 = vcombine.high %v534, %v534
    %v540 = vunpack.c.l.s4 1966171168
    %v541 = vunpack.c.0.s8 %v540
    %v542 = vlaneseq
    %v543 = vshrl.u32 %v542, 7
    %v544 = vsub.s32 %v541, %v543
    %v545 = vrot.slane %v534, %v544
    %v547 = vunpack.c.l.s4 1966171168
    %v548 = vunpack.c.0.s8 %v547
    %v549 = vlaneseq
    %v550 = vshrl.u32 %v549, 7
    %v551 = vsub.s32 %v548, %v550
    %v552 = vrot.slane %v538, %v551
    %v553 = vcombine.high %v545, %v545
    %v554 = vcombine.high %v552, %v552
    %v556 = vunpack.c.l.s4 1966171168
    %v557 = vunpack.c.0.s8 %v556
    %v558 = vlaneseq
    %v559 = vshrl.u32 %v558, 7
    %v560 = vsub.s32 %v557, %v559
    %v561 = vrot.slane %v545, %v560
    %v563 = vunpack.c.l.s4 1966171168
    %v564 = vunpack.c.0.s8 %v563
    %v565 = vlaneseq
    %v566 = vshrl.u32 %v565, 7
    %v567 = vsub.s32 %v564, %v566
    %v568 = vrot.slane %v552, %v567
    %v570 = vunpack.c.l.s4 1966171168
    %v571 = vunpack.c.0.s8 %v570
    %v572 = vlaneseq
    %v573 = vshrl.u32 %v572, 7
    %v574 = vsub.s32 %v571, %v573
    %v575 = vrot.slane %v553, %v574
    %v577 = vunpack.c.l.s4 1966171168
    %v578 = vunpack.c.0.s8 %v577
    %v579 = vlaneseq
    %v580 = vshrl.u32 %v579, 7
    %v581 = vsub.s32 %v578, %v580
    %v582 = vrot.slane %v554, %v581
    %v583 = vcombine.high %v561, %v561
    %v584 = vcombine.high %v568, %v568
    %v585 = vcombine.high %v575, %v575
    %v586 = vcombine.high %v582, %v582
    %v587 = vlaneseq
    %v588 = vshrl.u32 %v587, 7
    %v589 = vsub.s32 0, %v588
    %v590 = vrot.slane %v561, %v589
    %v591 = vlaneseq
    %v592 = vshrl.u32 %v591, 7
    %v593 = vsub.s32 0, %v592
    %v594 = vrot.slane %v575, %v593
    %v595 = vlaneseq
    %v596 = vshrl.u32 %v595, 7
    %v597 = vsub.s32 0, %v596
    %v598 = vrot.slane %v583, %v597
    %v599 = vlaneseq
    %v600 = vshrl.u32 %v599, 7
    %v601 = vsub.s32 0, %v600
    %v602 = vrot.slane %v585, %v601
    %v603 = vlaneseq
    %v604 = vshrl.u32 %v603, 7
    %v605 = vsub.s32 0, %v604
    %v606 = vrot.slane %v568, %v605
    %v607 = vlaneseq
    %v608 = vshrl.u32 %v607, 7
    %v609 = vsub.s32 0, %v608
    %v610 = vrot.slane %v582, %v609
    %v611 = vlaneseq
    %v612 = vshrl.u32 %v611, 7
    %v613 = vsub.s32 0, %v612
    %v614 = vrot.slane %v584, %v613
    %v615 = vlaneseq
    %v616 = vshrl.u32 %v615, 7
    %v617 = vsub.s32 0, %v616
    %v618 = vrot.slane %v586, %v617
    %v627 = vadd.f32 %v423, %v590
    %v628 = vadd.f32 %v428, %v594
    %v629 = vadd.f32 %v433, %v598
    %v630 = vadd.f32 %v438, %v602
    %v631 = vadd.f32 %v443, %v606
    %v632 = vadd.f32 %v448, %v610
    %v633 = vadd.f32 %v453, %v614
    %v634 = vadd.f32 %v458, %v618
    %v635 = vld [vmem:[%s5] sm:$0x1]
    %v637 = vlaneseq
    %v638 = vshrl.u32 %v637, 7
    %v639 = vsub.s32 0, %v638
    %v640 = vrot.slane %v635, %v639
    %v642 = vadd.f32 %v627, %v640
    %v643 = vadd.f32 %v628, %v640
    %v644 = vadd.f32 %v629, %v640
    %v645 = vadd.f32 %v630, %v640
    %v646 = vadd.f32 %v631, %v640
    %v647 = vadd.f32 %v632, %v640
    %v648 = vadd.f32 %v633, %v640
    %v649 = vadd.f32 %v634, %v640
    %v650 = vmax.f32 %v642, 0.0
    %v651 = vmax.f32 %v643, 0.0
    %v652 = vmax.f32 %v644, 0.0
    %v653 = vmax.f32 %v645, 0.0
    %v654 = vmax.f32 %v646, 0.0
    %v655 = vmax.f32 %v647, 0.0
    %v656 = vmax.f32 %v648, 0.0
    %v657 = vmax.f32 %v649, 0.0
    %v658 = vld [vmem:[%s6] sm:$0x1]
    %v660 = vlaneseq
    %v661 = vshrl.u32 %v660, 7
    %v662 = vsub.s32 0, %v661
    %v663 = vrot.slane %v658, %v662
    %v665 = vmul.f32 %v650, %v663
    %v666 = vmul.f32 %v651, %v663
    %v667 = vmul.f32 %v652, %v663
    %v668 = vmul.f32 %v653, %v663
    %v669 = vmul.f32 %v654, %v663
    %v670 = vmul.f32 %v655, %v663
    %v671 = vmul.f32 %v656, %v663
    %v672 = vmul.f32 %v657, %v663
    %v673 = vsel %vm202, %v665, 0.0
    %674 = vadd.xlane.f32.xlu0 %v673
    %v675 = vpop.xlane.xlu0 %674
    %v676 = vsel %vm202, %v666, 0.0
    %677 = vadd.xlane.f32.xlu0 %v676
    %v678 = vpop.xlane.xlu0 %677
    %v679 = vsel %vm202, %v667, 0.0
    %680 = vadd.xlane.f32.xlu0 %v679
    %v681 = vpop.xlane.xlu0 %680
    %v682 = vsel %vm202, %v668, 0.0
    %683 = vadd.xlane.f32.xlu0 %v682
    %v684 = vpop.xlane.xlu0 %683
    %v685 = vsel %vm202, %v669, 0.0
    %686 = vadd.xlane.f32.xlu0 %v685
    %v687 = vpop.xlane.xlu0 %686
    %v688 = vsel %vm202, %v670, 0.0
    %689 = vadd.xlane.f32.xlu0 %v688
    %v690 = vpop.xlane.xlu0 %689
    %v691 = vsel %vm202, %v671, 0.0
    %692 = vadd.xlane.f32.xlu0 %v691
    %v693 = vpop.xlane.xlu0 %692
    %v694 = vsel %vm202, %v672, 0.0
    %695 = vadd.xlane.f32.xlu0 %v694
    %v696 = vpop.xlane.xlu0 %695
    %s697 = sld [smem:[#allocation8]]
    %v698 = vstv %s697
    %v699 = vadd.f32 %v675, %v698
    %v700 = vadd.f32 %v678, %v698
    %v701 = vadd.f32 %v681, %v698
    %v702 = vadd.f32 %v684, %v698
    %v703 = vadd.f32 %v687, %v698
    %v704 = vadd.f32 %v690, %v698
    %v705 = vadd.f32 %v693, %v698
    %v706 = vadd.f32 %v696, %v698
    %v707 = vxor.u32 %v699, 2147483648
    %v708 = vxor.u32 %v700, 2147483648
    %v709 = vxor.u32 %v701, 2147483648
    %v710 = vxor.u32 %v702, 2147483648
    %v711 = vxor.u32 %v703, 2147483648
    %v712 = vxor.u32 %v704, 2147483648
    %v713 = vxor.u32 %v705, 2147483648
    %v714 = vxor.u32 %v706, 2147483648
    %v715 = vmul.f32 %v707, 1.442695
    %v716 = vpow.pop %v715
    %v717 = vmul.f32 %v708, 1.442695
    %v718 = vpow.pop %v717
    %v719 = vmul.f32 %v709, 1.442695
    %v720 = vpow.pop %v719
    %v721 = vmul.f32 %v710, 1.442695
    %v722 = vpow.pop %v721
    %v723 = vmul.f32 %v711, 1.442695
    %v724 = vpow.pop %v723
    %v725 = vmul.f32 %v712, 1.442695
    %v726 = vpow.pop %v725
    %v727 = vmul.f32 %v713, 1.442695
    %v728 = vpow.pop %v727
    %v729 = vmul.f32 %v714, 1.442695
    %v730 = vpow.pop %v729
    %v731 = vadd.f32 %v716, 1.0
    %v732 = vadd.f32 %v718, 1.0
    %v733 = vadd.f32 %v720, 1.0
    %v734 = vadd.f32 %v722, 1.0
    %v735 = vadd.f32 %v724, 1.0
    %v736 = vadd.f32 %v726, 1.0
    %v737 = vadd.f32 %v728, 1.0
    %v738 = vadd.f32 %v730, 1.0
    %v739 = vrcp.pop %v731
    %v740 = vmul.f32 1.0, %v739
    %v741 = vrcp.pop %v732
    %v742 = vmul.f32 1.0, %v741
    %v743 = vrcp.pop %v733
    %v744 = vmul.f32 1.0, %v743
    %v745 = vrcp.pop %v734
    %v746 = vmul.f32 1.0, %v745
    %v747 = vrcp.pop %v735
    %v748 = vmul.f32 1.0, %v747
    %v749 = vrcp.pop %v736
    %v750 = vmul.f32 1.0, %v749
    %v751 = vrcp.pop %v737
    %v752 = vmul.f32 1.0, %v751
    %v753 = vrcp.pop %v738
    %v754 = vmul.f32 1.0, %v753
    %v755 = vmul.f32 %v740, %v87
    %v756 = vmul.f32 %v742, %v88
    %v757 = vmul.f32 %v744, %v89
    %v758 = vmul.f32 %v746, %v90
    %v759 = vmul.f32 %v748, %v91
    %v760 = vmul.f32 %v750, %v92
    %v761 = vmul.f32 %v752, %v93
    %v762 = vmul.f32 %v754, %v94
    %v763 = vsel %vm202, %v755, 0.0
    %v764 = vrot.slane %v763, 4
    %v765 = vadd.f32 %v763, %v764
    %v766 = vrot.slane %v765, 2
    %v767 = vadd.f32 %v765, %v766
    %v768 = vrot.slane %v767, 1
    %v769 = vadd.f32 %v767, %v768
    %v770 = vsel %vm202, %v756, 0.0
    %v771 = vrot.slane %v770, 4
    %v772 = vadd.f32 %v770, %v771
    %v773 = vrot.slane %v772, 2
    %v774 = vadd.f32 %v772, %v773
    %v775 = vrot.slane %v774, 1
    %v776 = vadd.f32 %v774, %v775
    %v777 = vsel %vm202, %v757, 0.0
    %v778 = vrot.slane %v777, 4
    %v779 = vadd.f32 %v777, %v778
    %v780 = vrot.slane %v779, 2
    %v781 = vadd.f32 %v779, %v780
    %v782 = vrot.slane %v781, 1
    %v783 = vadd.f32 %v781, %v782
    %v784 = vsel %vm202, %v758, 0.0
    %v785 = vrot.slane %v784, 4
    %v786 = vadd.f32 %v784, %v785
    %v787 = vrot.slane %v786, 2
    %v788 = vadd.f32 %v786, %v787
    %v789 = vrot.slane %v788, 1
    %v790 = vadd.f32 %v788, %v789
    %v791 = vsel %vm202, %v759, 0.0
    %v792 = vrot.slane %v791, 4
    %v793 = vadd.f32 %v791, %v792
    %v794 = vrot.slane %v793, 2
    %v795 = vadd.f32 %v793, %v794
    %v796 = vrot.slane %v795, 1
    %v797 = vadd.f32 %v795, %v796
    %v798 = vsel %vm202, %v760, 0.0
    %v799 = vrot.slane %v798, 4
    %v800 = vadd.f32 %v798, %v799
    %v801 = vrot.slane %v800, 2
    %v802 = vadd.f32 %v800, %v801
    %v803 = vrot.slane %v802, 1
    %v804 = vadd.f32 %v802, %v803
    %v805 = vsel %vm202, %v761, 0.0
    %v806 = vrot.slane %v805, 4
    %v807 = vadd.f32 %v805, %v806
    %v808 = vrot.slane %v807, 2
    %v809 = vadd.f32 %v807, %v808
    %v810 = vrot.slane %v809, 1
    %v811 = vadd.f32 %v809, %v810
    %v812 = vsel %vm202, %v762, 0.0
    %v813 = vrot.slane %v812, 4
    %v814 = vadd.f32 %v812, %v813
    %v815 = vrot.slane %v814, 2
    %v816 = vadd.f32 %v814, %v815
    %v817 = vrot.slane %v816, 1
    %v818 = vadd.f32 %v816, %v817
    %v819 = vld [vmem:[%s7] sm:$0xff]
    %v820 = vld [vmem:[%s7 + $0x8] sm:$0xff]
    %v821 = vld [vmem:[%s7 + $0x10] sm:$0xff]
    %v822 = vld [vmem:[%s7 + $0x18] sm:$0xff]
    %v823 = vld [vmem:[#allocation6] sm:$0xff]
    %v824 = vld [vmem:[#allocation6 + $0x8] sm:$0xff]
    %v825 = vld [vmem:[#allocation6 + $0x10] sm:$0xff]
    %v826 = vld [vmem:[#allocation6 + $0x18] sm:$0xff]
    %827 = vmatprep.subr.mxu0 0.0
    %828 = vmatpush1.msra.mxu0 0.0
    %829 = vmatprep.subr.mxu0 0.0
    %830 = vmatpush1.msra.mxu0 0.0
    %831 = vmatprep.subr.mxu0 0.0
    %832 = vmatpush1.msra.mxu0 0.0
    %833 = vmatprep.subr.mxu0 0.0
    %834 = vmatpush1.msra.mxu0 0.0
    %835 = vmatprep.subr.mxu0 0.0
    %836 = vmatpush1.msra.mxu0 0.0
    %837 = vmatprep.subr.mxu0 0.0
    %838 = vmatpush1.msra.mxu0 0.0
    %839 = vmatprep.subr.mxu0 0.0
    %840 = vmatpush1.msra.mxu0 0.0
    %841 = vmatprep.subr.mxu0 0.0
    %842 = vmatpush1.msra.mxu0 0.0
    %843 = vmatprep.subr.mxu0 0.0
    %844 = vmatpush1.msra.mxu0 0.0
    %845 = vmatprep.subr.mxu0 0.0
    %846 = vmatpush1.msra.mxu0 0.0
    %847 = vmatprep.subr.mxu0 0.0
    %848 = vmatpush1.msra.mxu0 0.0
    %849 = vmatprep.subr.mxu0 0.0
    %850 = vmatpush1.msra.mxu0 0.0
    %851 = vmatprep.subr.mxu0 0.0
    %852 = vmatpush1.msra.mxu0 %v826
    %853 = vmatprep.subr.mxu0 0.0
    %854 = vmatpush1.msra.mxu0 %v825
    %855 = vmatprep.subr.mxu0 0.0
    %856 = vmatpush1.msra.mxu0 %v824
    %857 = vmatprep.subr.mxu0 0.0
    %858 = vmatpush1.msra.mxu0 %v823
    %859 = vmatprep.subr.mxu0 0.0
    %860 = vmatpush2.msra.mxu0 0.0
    %861 = vmatprep.subr.mxu0 0.0
    %862 = vmatpush2.msra.mxu0 0.0
    %863 = vmatprep.subr.mxu0 0.0
    %864 = vmatpush2.msra.mxu0 0.0
    %865 = vmatprep.subr.mxu0 0.0
    %866 = vmatpush2.msra.mxu0 0.0
    %867 = vmatprep.subr.mxu0 0.0
    %868 = vmatpush2.msra.mxu0 0.0
    %869 = vmatprep.subr.mxu0 0.0
    %870 = vmatpush2.msra.mxu0 0.0
    %871 = vmatprep.subr.mxu0 0.0
    %872 = vmatpush2.msra.mxu0 0.0
    %873 = vmatprep.subr.mxu0 0.0
    %874 = vmatpush2.msra.mxu0 0.0
    %875 = vmatprep.subr.mxu0 0.0
    %876 = vmatpush2.msra.mxu0 0.0
    %877 = vmatprep.subr.mxu0 0.0
    %878 = vmatpush2.msra.mxu0 0.0
    %879 = vmatprep.subr.mxu0 0.0
    %880 = vmatpush2.msra.mxu0 0.0
    %881 = vmatprep.subr.mxu0 0.0
    %882 = vmatpush2.msra.mxu0 0.0
    %883 = vmatprep.subr.mxu0 0.0
    %884 = vmatpush2.msra.mxu0 0.0
    %885 = vmatprep.subr.mxu0 0.0
    %886 = vmatpush2.msra.mxu0 0.0
    %887 = vmatprep.subr.mxu0 0.0
    %888 = vmatpush2.msra.mxu0 0.0
    %889 = vmatprep.subr.mxu0 0.0
    %890 = vmatpush2.msra.mxu0 0.0
    %891 = vmatprep.mubr.f32.mxu0 0.0
    %892 = vmatmul.mubr.f32.gmra.mxu0 %v465
    %v893 = vpop.f32.mrf.mxu0
    %v894 = vadd.f32 0.0, %v893
    %v895 = vpop.f32.mrf.mxu0
    %896 = vdwg.mxu0
    %vm905 = vcmask 1041409
    %v906 = vsel %vm905, %v776, %v769
    %vm907 = vcmask 1042434
    %v908 = vsel %vm907, %v783, %v906
    %vm909 = vcmask 1043459
    %v910 = vsel %vm909, %v790, %v908
    %vm911 = vcmask 1044484
    %v912 = vsel %vm911, %v797, %v910
    %vm913 = vcmask 1045509
    %v914 = vsel %vm913, %v804, %v912
    %vm915 = vcmask 1046534
    %v916 = vsel %vm915, %v811, %v914
    %vm917 = vcmask 1047559
    %v918 = vsel %vm917, %v818, %v916
    %v919 = vsel %vm202, %v918, 0
    %921 = vmatprep.subr.mxu0 0.0
    %922 = vmatpush1.msra.mxu0 0.0
    %923 = vmatprep.subr.mxu0 0.0
    %924 = vmatpush1.msra.mxu0 0.0
    %925 = vmatprep.subr.mxu0 0.0
    %926 = vmatpush1.msra.mxu0 0.0
    %927 = vmatprep.subr.mxu0 0.0
    %928 = vmatpush1.msra.mxu0 0.0
    %929 = vmatprep.subr.mxu0 0.0
    %930 = vmatpush1.msra.mxu0 0.0
    %931 = vmatprep.subr.mxu0 0.0
    %932 = vmatpush1.msra.mxu0 0.0
    %933 = vmatprep.subr.mxu0 0.0
    %934 = vmatpush1.msra.mxu0 0.0
    %935 = vmatprep.subr.mxu0 0.0
    %936 = vmatpush1.msra.mxu0 0.0
    %937 = vmatprep.subr.mxu0 0.0
    %938 = vmatpush1.msra.mxu0 0.0
    %939 = vmatprep.subr.mxu0 0.0
    %940 = vmatpush1.msra.mxu0 0.0
    %941 = vmatprep.subr.mxu0 0.0
    %942 = vmatpush1.msra.mxu0 0.0
    %943 = vmatprep.subr.mxu0 0.0
    %944 = vmatpush1.msra.mxu0 0.0
    %945 = vmatprep.subr.mxu0 0.0
    %946 = vmatpush1.msra.mxu0 %v822
    %947 = vmatprep.subr.mxu0 0.0
    %948 = vmatpush1.msra.mxu0 %v821
    %949 = vmatprep.subr.mxu0 0.0
    %950 = vmatpush1.msra.mxu0 %v820
    %951 = vmatprep.subr.mxu0 0.0
    %952 = vmatpush1.msra.mxu0 %v819
    %953 = vmatprep.subr.mxu0 0.0
    %954 = vmatpush2.msra.mxu0 0.0
    %955 = vmatprep.subr.mxu0 0.0
    %956 = vmatpush2.msra.mxu0 0.0
    %957 = vmatprep.subr.mxu0 0.0
    %958 = vmatpush2.msra.mxu0 0.0
    %959 = vmatprep.subr.mxu0 0.0
    %960 = vmatpush2.msra.mxu0 0.0
    %961 = vmatprep.subr.mxu0 0.0
    %962 = vmatpush2.msra.mxu0 0.0
    %963 = vmatprep.subr.mxu0 0.0
    %964 = vmatpush2.msra.mxu0 0.0
    %965 = vmatprep.subr.mxu0 0.0
    %966 = vmatpush2.msra.mxu0 0.0
    %967 = vmatprep.subr.mxu0 0.0
    %968 = vmatpush2.msra.mxu0 0.0
    %969 = vmatprep.subr.mxu0 0.0
    %970 = vmatpush2.msra.mxu0 0.0
    %971 = vmatprep.subr.mxu0 0.0
    %972 = vmatpush2.msra.mxu0 0.0
    %973 = vmatprep.subr.mxu0 0.0
    %974 = vmatpush2.msra.mxu0 0.0
    %975 = vmatprep.subr.mxu0 0.0
    %976 = vmatpush2.msra.mxu0 0.0
    %977 = vmatprep.subr.mxu0 0.0
    %978 = vmatpush2.msra.mxu0 0.0
    %979 = vmatprep.subr.mxu0 0.0
    %980 = vmatpush2.msra.mxu0 0.0
    %981 = vmatprep.subr.mxu0 0.0
    %982 = vmatpush2.msra.mxu0 0.0
    %983 = vmatprep.subr.mxu0 0.0
    %984 = vmatpush2.msra.mxu0 0.0
    %985 = vmatprep.mubr.f32.mxu0 0.0
    %986 = vmatmul.mubr.f32.gmra.mxu0 %v919
    %v987 = vpop.f32.mrf.mxu0
    %v988 = vadd.f32 %v894, %v987
    %v989 = vpop.f32.mrf.mxu0
    %990 = vdwg.mxu0
    %v991 = vld [vmem:[%s9] sm:$0x1]
    %v993 = vlaneseq
    %v994 = vshrl.u32 %v993, 7
    %v995 = vsub.s32 0, %v994
    %v996 = vrot.slane %v991, %v995
    %v998 = vadd.f32 %v988, %v996
    %v999 = vmax.f32 %v998, 0.0
    %v1000 = vld [vmem:[%s10] sm:$0xff]
    %v1001 = vld [vmem:[%s10 + $0x8] sm:$0xff]
    %v1002 = vld [vmem:[%s10 + $0x10] sm:$0xff]
    %v1003 = vld [vmem:[%s10 + $0x18] sm:$0xff]
    %v1004 = vld [vmem:[%s10 + $0x20] sm:$0xff]
    %v1005 = vld [vmem:[%s10 + $0x28] sm:$0xff]
    %v1006 = vld [vmem:[%s10 + $0x30] sm:$0xff]
    %v1007 = vld [vmem:[%s10 + $0x38] sm:$0xff]
    %v1008 = vld [vmem:[%s10 + $0x40] sm:$0xff]
    %v1009 = vld [vmem:[%s10 + $0x48] sm:$0xff]
    %v1010 = vld [vmem:[%s10 + $0x50] sm:$0xff]
    %v1011 = vld [vmem:[%s10 + $0x58] sm:$0xff]
    %v1012 = vld [vmem:[%s10 + $0x60] sm:$0xff]
    %v1013 = vld [vmem:[%s10 + $0x68] sm:$0xff]
    %v1014 = vld [vmem:[%s10 + $0x70] sm:$0xff]
    %v1015 = vld [vmem:[%s10 + $0x78] sm:$0xff]
    %v1016 = vld [vmem:[%s11] sm:$0x1]
    %v1018 = vlaneseq
    %v1019 = vshrl.u32 %v1018, 7
    %v1020 = vsub.s32 0, %v1019
    %v1021 = vrot.slane %v1016, %v1020
    %1023 = vmatprep.subr.mxu0 0.0
    %1024 = vmatpush1.msra.mxu0 %v1015
    %1025 = vmatprep.subr.mxu0 0.0
    %1026 = vmatpush1.msra.mxu0 %v1014
    %1027 = vmatprep.subr.mxu0 0.0
    %1028 = vmatpush1.msra.mxu0 %v1013
    %1029 = vmatprep.subr.mxu0 0.0
    %1030 = vmatpush1.msra.mxu0 %v1012
    %1031 = vmatprep.subr.mxu0 0.0
    %1032 = vmatpush1.msra.mxu0 %v1011
    %1033 = vmatprep.subr.mxu0 0.0
    %1034 = vmatpush1.msra.mxu0 %v1010
    %1035 = vmatprep.subr.mxu0 0.0
    %1036 = vmatpush1.msra.mxu0 %v1009
    %1037 = vmatprep.subr.mxu0 0.0
    %1038 = vmatpush1.msra.mxu0 %v1008
    %1039 = vmatprep.subr.mxu0 0.0
    %1040 = vmatpush1.msra.mxu0 %v1007
    %1041 = vmatprep.subr.mxu0 0.0
    %1042 = vmatpush1.msra.mxu0 %v1006
    %1043 = vmatprep.subr.mxu0 0.0
    %1044 = vmatpush1.msra.mxu0 %v1005
    %1045 = vmatprep.subr.mxu0 0.0
    %1046 = vmatpush1.msra.mxu0 %v1004
    %1047 = vmatprep.subr.mxu0 0.0
    %1048 = vmatpush1.msra.mxu0 %v1003
    %1049 = vmatprep.subr.mxu0 0.0
    %1050 = vmatpush1.msra.mxu0 %v1002
    %1051 = vmatprep.subr.mxu0 0.0
    %1052 = vmatpush1.msra.mxu0 %v1001
    %1053 = vmatprep.subr.mxu0 0.0
    %1054 = vmatpush1.msra.mxu0 %v1000
    %1055 = vmatprep.subr.mxu0 0.0
    %1056 = vmatpush2.msra.mxu0 0.0
    %1057 = vmatprep.subr.mxu0 0.0
    %1058 = vmatpush2.msra.mxu0 0.0
    %1059 = vmatprep.subr.mxu0 0.0
    %1060 = vmatpush2.msra.mxu0 0.0
    %1061 = vmatprep.subr.mxu0 0.0
    %1062 = vmatpush2.msra.mxu0 0.0
    %1063 = vmatprep.subr.mxu0 0.0
    %1064 = vmatpush2.msra.mxu0 0.0
    %1065 = vmatprep.subr.mxu0 0.0
    %1066 = vmatpush2.msra.mxu0 0.0
    %1067 = vmatprep.subr.mxu0 0.0
    %1068 = vmatpush2.msra.mxu0 0.0
    %1069 = vmatprep.subr.mxu0 0.0
    %1070 = vmatpush2.msra.mxu0 0.0
    %1071 = vmatprep.subr.mxu0 0.0
    %1072 = vmatpush2.msra.mxu0 0.0
    %1073 = vmatprep.subr.mxu0 0.0
    %1074 = vmatpush2.msra.mxu0 0.0
    %1075 = vmatprep.subr.mxu0 0.0
    %1076 = vmatpush2.msra.mxu0 0.0
    %1077 = vmatprep.subr.mxu0 0.0
    %1078 = vmatpush2.msra.mxu0 0.0
    %1079 = vmatprep.subr.mxu0 0.0
    %1080 = vmatpush2.msra.mxu0 0.0
    %1081 = vmatprep.subr.mxu0 0.0
    %1082 = vmatpush2.msra.mxu0 0.0
    %1083 = vmatprep.subr.mxu0 0.0
    %1084 = vmatpush2.msra.mxu0 0.0
    %1085 = vmatprep.subr.mxu0 0.0
    %1086 = vmatpush2.msra.mxu0 0.0
    %1087 = vmatprep.mubr.f32.mxu0 0.0
    %1088 = vmatmul.mubr.f32.gmra.mxu0 %v999
    %v1089 = vpop.f32.mrf.mxu0
    %v1090 = vadd.f32 %v1021, %v1089
    %v1091 = vpop.f32.mrf.mxu0
    %1092 = vdwg.mxu0
    %v1093 = vmax.f32 %v1090, 0.0
    %v1094 = vld [vmem:[%s12] sm:$0x1]
    %v1096 = vlaneseq
    %v1097 = vshrl.u32 %v1096, 7
    %v1098 = vsub.s32 0, %v1097
    %v1099 = vrot.slane %v1094, %v1098
    %v1101 = vmul.f32 %v1093, %v1099
    %vm1102 = vcmask 523264
    %v1103 = vsel %vm1102, %v1101, 0.0
    %1104 = vadd.xlane.f32.xlu0 %v1103
    %v1105 = vpop.xlane.xlu0 %1104
    %s1106 = sld [smem:[#allocation8 + $0x1]]
    %v1107 = vstv %s1106
    %v1108 = vadd.f32 %v1105, %v1107
    %v1109 = vxor.u32 %v1108, 2147483648
    %v1110 = vmul.f32 %v1109, 1.442695
    %v1111 = vpow.pop %v1110
    %v1112 = vadd.f32 %v1111, 1.0
    %v1113 = vrcp.pop %v1112
    %v1114 = vmul.f32 1.0, %v1113
    %v1116 = vlaneseq
    %v1117 = vand.u32 %v1116, 127
    %v1118 = vlaneseq
    %v1119 = vshrl.u32 %v1118, 7
    %v1120 = vsub.s32 %v1117, %v1119
    %v1121 = vrot.slane %v1114, %v1120
    %vm1123 = vcmask 57344
    %1124 = vst.msk [vmem:[#allocation9] sm:$0x1] %vm1123, %v1121
    // Predicated region
    $region70: #{tpu_custom_call.1} parent=1 // pred_check
      _
    $region71: #{tpu_custom_call.1} parent=1 // pred_check_branch
      %1126 = sbr.rel (0) target = $region73
    $region72: #{tpu_custom_call.1} parent=1 // pred_region
      %s1128 = ssub.s32 16, 16
      %1129 = vsyncadd [#allocation4], %s1128
      %s1131 = sshll.u32 [#allocation9], 4
      %s1132 = int_to_ptr.vmem [resolvable:$true] %s1131
      %1134 = dma.vmem_to_hbm [thread:$0]  %s1132, 16, %s14, [#allocation4]
    $region73: #{tpu_custom_call.1} parent=1 // pred_fallthru
      _
    // Predicated region
    $region74: #{tpu_custom_call.1} parent=1 // pred_check
      _
    $region75: #{tpu_custom_call.1} parent=1 // pred_check_branch
      %1136 = sbr.rel (0) target = $region77
    $region76: #{tpu_custom_call.1} parent=1 // pred_region
      %1137 = dma.done [#allocation4], 16
    $region77: #{tpu_custom_call.1} parent=1 // pred_fallthru
      _
    %1138 = vsyncpa [#allocation3], 1
    %1139 = vsyncpa [#allocation7], 1
    %1140 = vsyncpa [#allocation4], 1
    %1141 = vsyncpa [#allocation5], 1

</llo_original>
